<compile_context>
chip_gen: v6e
topology: v6e:2x2x1
jax: 0.10.0
libtpu: 0.0.40
codegen_flags: <defaults>
</compile_context>

<pallas_src>
import functools
import math

import jax
import jax.numpy as jnp
from jax import lax
from jax.experimental import pallas as pl
from jax.experimental.pallas import tpu as pltpu


def _cdiv(a, b):
    return -(-a // b)


def _round_up(a, b):
    return _cdiv(a, b) * b


def _phconv_kernel(w_ref, x_ref, o_ref, *, taps, dilation, t_out):
    """One (batch, L-tile) grid step.

    w_ref: (C_out_p, K*C_in_p)            resident fused weight (bf16)
    x_ref: (1, 1, C_in_p, T_out + halo)   if taps > 1  (halo'd window, stride==1)
           (1, K*C_in_p, T_out)           if taps == 1 (pre-im2col'ed, stride>1)
    o_ref: (1, C_out_p, T_out)            float32 output tile
    """
    if taps == 1:
        x_col = x_ref[0]                                   # (K*C_in_p, T_out)
    else:
        xw = x_ref[0, 0]                                   # (C_in_p, T_in)
        # Static, contiguous lane slices (XLU rotations, hidden under the
        # matmul) stacked along sublanes -> single fused MXU matmul.
        x_col = jnp.concatenate(
            [xw[:, k * dilation: k * dilation + t_out] for k in range(taps)],
            axis=0)                                        # (K*C_in_p, T_out)
    o_ref[0] = jnp.dot(w_ref[...], x_col,
                       preferred_element_type=jnp.float32).astype(o_ref.dtype)


def ph_conv1d(x, A, Fw, *, stride=1, padding=0, dilation=1,
              tile_l=512, compute_dtype=jnp.bfloat16):
    """Forward of PHConv1D.

    x  : (B, in_features, L) float32
    A  : (n, n, n)
    Fw : (n, out_features//n, in_features//n, K)
    returns (out (B, out_features, L_out) float32, W (out, in, K) float32)
    """
    n = A.shape[0]
    _, o_blk, i_blk, k_taps = Fw.shape
    out_features = n * o_blk
    in_features = n * i_blk
    assert x.shape[1] == in_features

    # Kronecker-sum weight: W[p*O+o, q*I+i, k] = sum_a A[a,p,q] * F[a,o,i,k]
    # (identical to kronecker_product1(A, F).sum(0) in the PyTorch module).
    W = jnp.einsum("apq,aoik->poqik", A.astype(jnp.float32),
                   Fw.astype(jnp.float32))
    W = W.reshape(out_features, in_features, k_taps)

    b = x.shape[0]
    l_in = x.shape[2]
    l_pad = l_in + 2 * padding
    l_out = (l_pad - dilation * (k_taps - 1) - 1) // stride + 1
    if l_out <= 0:
        raise ValueError("non-positive output length")

    # Alignment / tiling parameters.
    c_in_p = _round_up(in_features, 8)
    c_out_p = _round_up(out_features, 8)
    itemsize = jnp.dtype(compute_dtype).itemsize
    halo = dilation * (k_taps - 1)

    tile_l = _round_up(max(int(tile_l), 128), 128)
    t_out = min(tile_l, _round_up(l_out, 128))     # lane-dense output tile
    # Auto-shrink the spatial tile so double-buffered in/out tiles + the
    # resident fused weight fit comfortably inside scoped VMEM (v7x-safe).
    vmem_budget = 32 * 1024 * 1024
    w_bytes = c_out_p * k_taps * c_in_p * itemsize
    while t_out > 128:
        x_bytes = k_taps * c_in_p * (t_out + halo) * itemsize
        o_bytes = c_out_p * t_out * 4
        if 2 * x_bytes + 2 * o_bytes + 2 * w_bytes <= vmem_budget:
            break
        t_out -= 128
    num_tiles = _cdiv(l_out, t_out)
    l_out_p = num_tiles * t_out
    use_im2col = (stride != 1) or (halo > t_out)

    # Fused weight: (C_out_p, K*C_in_p), tap-major columns.
    W_p = jnp.zeros((c_out_p, c_in_p, k_taps), jnp.float32)
    W_p = W_p.at[:out_features, :in_features, :].set(W)
    w_fused = jnp.transpose(W_p, (0, 2, 1)).reshape(c_out_p, k_taps * c_in_p)
    w_fused = w_fused.astype(compute_dtype)

    # Activations: spatial zero-pad + channel zero-pad, cast to compute dtype.
    xp = jnp.pad(x.astype(compute_dtype),
                 ((0, 0), (0, c_in_p - in_features), (padding, padding)))

    if use_im2col:
        # stride>1 (or pathological dilation): do the strided gather once in
        # XLA so the kernel never issues lane-strided slices.
        ext_len = (l_out_p - 1) * stride + halo + 1
        pad_amt = max(0, ext_len - l_pad)
        x_ext = jnp.pad(xp, ((0, 0), (0, 0), (0, pad_amt)))
        cols = []
        for k in range(k_taps):
            start = k * dilation
            stop = start + (l_out_p - 1) * stride + 1
            cols.append(lax.slice(x_ext, (0, 0, start), (b, c_in_p, stop),
                                  (1, 1, stride)))
        x_in = jnp.concatenate(cols, axis=1)               # (B, K*C_in_p, L_out_p)
        x_block = (1, k_taps * c_in_p, t_out)
        x_index = lambda bi, li: (bi, 0, li)
        taps_in_kernel = 1
    else:
        # stride==1: materialize overlapping halo'd windows once (wrapper-side
        # layout plumbing); the kernel builds X_col from contiguous slices.
        t_in = t_out + halo
        ext_len = (num_tiles + 1) * t_out
        x_ext = jnp.pad(xp, ((0, 0), (0, 0), (0, ext_len - l_pad)))
        main = x_ext[:, :, : num_tiles * t_out].reshape(b, c_in_p, num_tiles, t_out)
        if halo:
            tail = x_ext[:, :, t_out:].reshape(b, c_in_p, num_tiles, t_out)
            tail = tail[:, :, :, :halo]
            win = jnp.concatenate([main, tail], axis=-1)   # (B, C_in_p, T, T_in)
        else:
            win = main
        x_in = jnp.transpose(win, (0, 2, 1, 3))            # (B, T, C_in_p, T_in)
        x_block = (1, 1, c_in_p, t_in)
        x_index = lambda bi, li: (bi, li, 0, 0)
        taps_in_kernel = k_taps

    # VMEM limit (double-buffered in/out + resident weight) with headroom.
    x_blk_bytes = itemsize
    for d in x_block:
        x_blk_bytes *= d
    o_blk_bytes = c_out_p * t_out * 4
    vmem_need = 2 * x_blk_bytes + 2 * o_blk_bytes + 2 * w_bytes
    vmem_limit = int(min(max(4 * vmem_need, 8 * 1024 * 1024), 48 * 1024 * 1024))

    cost = pl.CostEstimate(
        flops=2 * b * out_features * in_features * k_taps * l_out,
        transcendentals=0,
        bytes_accessed=int(x_in.size * itemsize + w_fused.size * itemsize
                           + b * c_out_p * l_out_p * 4),
    )

    kernel = functools.partial(_phconv_kernel, taps=taps_in_kernel,
                               dilation=dilation, t_out=t_out)

    out_p = pl.pallas_call(
        kernel,
        out_shape=jax.ShapeDtypeStruct((b, c_out_p, l_out_p), jnp.float32),
        grid_spec=pltpu.PrefetchScalarGridSpec(
            num_scalar_prefetch=0,
            grid=(b, num_tiles),
            in_specs=[
                pl.BlockSpec((c_out_p, k_taps * c_in_p), lambda bi, li: (0, 0)),
                pl.BlockSpec(x_block, x_index),
            ],
            out_specs=pl.BlockSpec((1, c_out_p, t_out), lambda bi, li: (bi, 0, li)),
        ),
        compiler_params=pltpu.CompilerParams(
            dimension_semantics=("parallel", "parallel"),
            vmem_limit_bytes=vmem_limit,
        ),
        cost_estimate=cost,
    )(w_fused, x_in)

    out = out_p[:, :out_features, :l_out]
    return out, W


def _xavier_uniform(key, shape):
    # torch.nn.init.xavier_uniform_ semantics.
    recep = 1
    for d in shape[2:]:
        recep *= d
    fan_in = shape[1] * recep
    fan_out = shape[0] * recep
    bound = math.sqrt(6.0 / (fan_in + fan_out))
    return jax.random.uniform(key, shape, jnp.float32, -bound, bound)


def _reference(x, W, stride, padding, dilation, compute_dtype):
    # XLA conv1d on the same (bf16-rounded) operands, f32 accumulation.
    return lax.conv_general_dilated(
        x.astype(compute_dtype), W.astype(compute_dtype),
        window_strides=(stride,), padding=[(padding, padding)],
        rhs_dilation=(dilation,), dimension_numbers=("NCH", "OIH", "NCH"),
        preferred_element_type=jnp.float32)


if __name__ == "__main__":
    n = 2
    in_features = 4
    out_features = 8
    kernel_size = 3
    batch = 2

    key = jax.random.PRNGKey(0)
    k_a, k_f, k_x1, k_x2 = jax.random.split(key, 4)

    A = _xavier_uniform(k_a, (n, n, n))
    Fw = _xavier_uniform(k_f, (n, out_features // n, in_features // n, kernel_size))
    # TODO(synk): self.bias is initialized in the PyTorch module but never used in
    # forward (F.conv1d is called without bias), so it is intentionally omitted.

    configs = [
        # (seq, stride, padding, dilation, tile_l)
        (16, 1, 1, 1, 512),    # stride-1 fast path, single lane-dense tile
        (16, 2, 2, 2, 512),    # stride>1 -> wrapper im2col path
        (300, 1, 1, 1, 128),   # multi-tile path, halo across tile boundaries
    ]
    for seq, stride, padding, dilation, tile_l in configs:
        kx = k_x1 if seq == 16 else k_x2
        x = jax.random.normal(kx, (batch, in_features, seq), jnp.float32)
        out, W = ph_conv1d(x, A, Fw, stride=stride, padding=padding,
                           dilation=dilation, tile_l=tile_l)
        out = jax.block_until_ready(out)
        l_out = (seq + 2 * padding - dilation * (kernel_size - 1) - 1) // stride + 1
        assert out.shape == (batch, out_features, l_out), out.shape
        ref = _reference(x, W, stride, padding, dilation, jnp.bfloat16)
        err = float(jnp.max(jnp.abs(out - ref)))
        assert jnp.allclose(out, ref, atol=1e-2, rtol=1e-2), (
            f"mismatch vs XLA conv reference for config "
            f"{(seq, stride, padding, dilation)}: max abs err {err}")
    print("KERNEL_OK")
</pallas_src>

<mosaic_0001>
module attributes {stable_mosaic.version = 11 : i64} {
  func.func @_phconv_kernel(%arg0: i32, %arg1: i32, %arg2: memref<8x24xbf16, #tpu.memory_space<vmem>>, %arg3: memref<1x1x8x130xbf16, #tpu.memory_space<vmem>>, %arg4: memref<1x8x128xf32, #tpu.memory_space<vmem>>) attributes {dimension_semantics = [#tpu.dimension_semantics<parallel>, #tpu.dimension_semantics<parallel>], iteration_bounds = array<i64: 2, 1>, scalar_prefetch = 0 : i64, scratch_operands = 0 : i64, tpu.core_type = #tpu.core_type<tc>, window_params = [{pipeline_mode = #tpu.pipeline_mode<synchronous>, transform_indices = @transform_0, window_bounds = array<i64: 8, 24>}, {transform_indices = @transform_1, window_bounds = array<i64: 1, 1, 8, 130>}, {transform_indices = @transform_2, window_bounds = array<i64: 1, 8, 128>}]} {
    %c0 = arith.constant 0 : index
    %c0_0 = arith.constant 0 : index
    %c0_1 = arith.constant 0 : index
    %c0_2 = arith.constant 0 : index
    %0 = vector.load %arg3[%c0, %c0_0, %c0_1, %c0_2] : memref<1x1x8x130xbf16, #tpu.memory_space<vmem>>, vector<1x1x8x130xbf16>
    %1 = vector.shape_cast %0 : vector<1x1x8x130xbf16> to vector<8x130xbf16>
    %2 = vector.extract_strided_slice %1 {offsets = [0, 0], sizes = [8, 128], strides = [1, 1]} : vector<8x130xbf16> to vector<8x128xbf16>
    %3 = vector.extract_strided_slice %1 {offsets = [0, 1], sizes = [8, 128], strides = [1, 1]} : vector<8x130xbf16> to vector<8x128xbf16>
    %4 = vector.extract_strided_slice %1 {offsets = [0, 2], sizes = [8, 128], strides = [1, 1]} : vector<8x130xbf16> to vector<8x128xbf16>
    %5 = tpu.concatenate %2, %3, %4 in 0 : vector<8x128xbf16>, vector<8x128xbf16>, vector<8x128xbf16> -> vector<24x128xbf16>
    %c0_3 = arith.constant 0 : index
    %c0_4 = arith.constant 0 : index
    %6 = vector.load %arg2[%c0_3, %c0_4] : memref<8x24xbf16, #tpu.memory_space<vmem>>, vector<8x24xbf16>
    %cst = arith.constant dense<0.000000e+00> : vector<8x128xf32>
    %7 = tpu.matmul %6, %5, %cst {dimension_numbers = #tpu.dot_dimension_numbers<[1], [0], [0], [1], [0, 0, 1, 1], [], []>} : vector<8x24xbf16>, vector<24x128xbf16>, vector<8x128xf32> -> vector<8x128xf32>
    %c0_5 = arith.constant 0 : index
    %c0_6 = arith.constant 0 : index
    %c0_7 = arith.constant 0 : index
    %8 = vector.load %arg4[%c0_5, %c0_6, %c0_7] : memref<1x8x128xf32, #tpu.memory_space<vmem>>, vector<1x8x128xf32>
    %9 = vector.shape_cast %8 : vector<1x8x128xf32> to vector<8x128xf32>
    %10 = vector.shape_cast %7 : vector<8x128xf32> to vector<1x8x128xf32>
    tpu.vector_store %arg4[%c0_5, %c0_6, %c0_7], %10 {strides = array<i32>} : memref<1x8x128xf32, #tpu.memory_space<vmem>>, vector<1x8x128xf32>,
    return
  }
  func.func @transform_0(%arg0: i32, %arg1: i32) -> (i32, i32) {
    %c0_i32 = arith.constant 0 : i32
    %c0_i32_0 = arith.constant 0 : i32
    %c0_i32_1 = arith.constant 0 : i32
    return %c0_i32, %c0_i32_0 : i32, i32
  }
  func.func @transform_1(%arg0: i32, %arg1: i32) -> (i32, i32, i32, i32) {
    %c0_i32 = arith.constant 0 : i32
    %c0_i32_0 = arith.constant 0 : i32
    %c0_i32_1 = arith.constant 0 : i32
    return %arg0, %arg1, %c0_i32, %c0_i32_0 : i32, i32, i32, i32
  }
  func.func @transform_2(%arg0: i32, %arg1: i32) -> (i32, i32, i32) {
    %c0_i32 = arith.constant 0 : i32
    %c0_i32_0 = arith.constant 0 : i32
    return %arg0, %c0_i32, %arg1 : i32, i32, i32
  }
}

</mosaic_0001>

<llo_original>
// kernel: tpu_custom_call.1
$region0: #{tpu_custom_call.1}
  #allocation0 [shape = 'u32[]', space=smem, size = 0x4, offset = 0x4, fixed_abs, tag = 'smem constant byte address 0x4 - core index']
  #allocation1 [shape = 'u32[144,128]{1,0:T(1,128)}', space=vmem, size = 0x12000, scoped, tag = 'internal scratch']
  %s0 = inlined_call_operand.hbm [shape: bf16[8,24], index: 0, kind: input, shape index: {}]
  %s1 = inlined_call_operand.hbm [shape: bf16[2,1,8,130], index: 1, kind: input, shape index: {}]
  %s2 = inlined_call_operand.hbm [shape: f32[2,8,128], index: 2, kind: output, shape index: {}]
  %s3 = sld [smem:[#allocation0]]
  $region49: #{tpu_custom_call.1} parent=0
    _
  %s5 = ssub.s32 1, %s3
  %s6 = scalar_select 0, %s5, %s3
  $region1: #{tpu_custom_call.1} parent=0
    #allocation2 [shape = 'u8[2048]{0}', space=vmem, size = 0x800, scoped, tag = 'input window, operand 0, single buffered']
    #allocation3 [shape = 's32[2]{0}', space=sflag, size = 0x8, scoped, tag = 'scoped memory for tpu_custom_call.1']
    #allocation4 [shape = 's32[2]{0}', space=sflag, size = 0x8, scoped, tag = 'scoped memory for tpu_custom_call.1']
    #allocation5 [shape = 'u8[8192]{0}', space=vmem, size = 0x2000, scoped, tag = 'input window, operand 1']
    #allocation6 [shape = 's32[2]{0}', space=sflag, size = 0x8, scoped, tag = 'scoped memory for tpu_custom_call.1']
    #allocation7 [shape = 'u8[8192]{0}', space=vmem, size = 0x2000, scoped, tag = 'output window, operand 0']
    %7 = vsyncpa [#allocation3], 0
    %8 = vsyncpa [#allocation6], 0
    %s9 = scalar_lea.sflag [#allocation6], 1
    %10 = vsyncpa %s9, 0
    %11 = vsyncpa [#allocation4], 0
    %s12 = scalar_lea.sflag [#allocation4], 1
    %13 = vsyncpa %s12, 0
    loop: start=0, step=1, limit=4
    $region2: #{tpu_custom_call.1} parent=1 // loop_pre_header
      _
    $region3: #{tpu_custom_call.1} parent=1 // loop_header
      %s15 = sphi 0, %s19
      %p16 = scmp.ge.s32.totalorder %s15, 4
      %s22 = sphi 0, %s34
      %s23 = sphi 0, %s30
      %s24 = sphi 0, %s22
      %s25 = sphi 0, %s23
      %s26 = sphi 0, %s24
      %s27 = sphi 0, %s25
      %s35 = sphi 0, %s35
      %s37 = sphi 0, %s35
      %s38 = sphi 0, %s37
      %s52 = sphi 0, %s38
      %s60 = sphi 0, %s62
      %s63 = sphi 0, %s60
      %s64 = sphi 0, %s63
      %s80 = sphi 0, %s64
      %s88 = sphi 0, %s90
      %s91 = sphi 0, %s88
      %s92 = sphi 0, %s91
      %s108 = sphi 0, %s92
    $region4: #{tpu_custom_call.1} parent=1 // loop_header_branch
      %18 = sbr.rel (%p16) target = $region8
    $region5: #{tpu_custom_call.1} parent=1 // loop_body
      %s20 = ssub.s32 %s15, 1
      %s21 = ssub.s32 %s15, 2
      %s28 = sadd.s32 1, %s23
      %p29 = scmp.ge.s32.totalorder %s28, 1
      %s30 = scalar_select %p29, 0, %s28
      %s31 = sadd.s32 1, %s22
      %s32 = scalar_select %p29, %s31, %s22
      %p33 = scmp.ge.s32.totalorder %s32, 2
      %s34 = scalar_select %p33, 0, %s32
      %s36 = sadd.s32 %s35, 1
      %p39 = scmp.eq.s32.totalorder %s15, 1
      %p40 = scmp.ne.s32.totalorder %s35, %s37
      %p41 = scmp.eq.s32.totalorder %s15, 0
      %p42 = por %p40, %p41
      %p43 = scmp.ne.s32.totalorder %s35, %s37
      %p44 = scmp.eq.s32.totalorder %s20, 1
      %p45 = por %p43, %p44
      %p46 = scmp.ne.s32.totalorder %s37, %s38
      %p47 = scmp.eq.s32.totalorder %s20, 0
      %p48 = por %p46, %p47
      %p49 = scmp.ne.s32.totalorder %s37, %s38
      %p50 = scmp.eq.s32.totalorder %s21, 1
      %p51 = por %p49, %p50
      %p53 = scmp.ne.s32.totalorder %s38, %s52
      %p54 = scmp.eq.s32.totalorder %s21, 0
      %p55 = por %p53, %p54
      %s56 = ssub.s32 %s22, %s34
      %s57 = ssub.s32 %s23, %s30
      %s58 = sor.u32 %s56, %s57
      %p59 = scmp.eq.s32.totalorder %s58, 0
      %s61 = sadd.s32 %s60, 1
      %s62 = scalar_select %p59, %s60, %s61
      %p65 = pneg %p59
      %p66 = scmp.eq.s32.totalorder %s15, 1
      %p67 = por %p65, %p66
      %p68 = scmp.ne.s32.totalorder %s60, %s63
      %p69 = scmp.eq.s32.totalorder %s15, 0
      %p70 = por %p68, %p69
      %p71 = scmp.ne.s32.totalorder %s60, %s63
      %p72 = scmp.eq.s32.totalorder %s20, 1
      %p73 = por %p71, %p72
      %p74 = scmp.ne.s32.totalorder %s63, %s64
      %p75 = scmp.eq.s32.totalorder %s20, 0
      %p76 = por %p74, %p75
      %p77 = scmp.ne.s32.totalorder %s63, %s64
      %p78 = scmp.eq.s32.totalorder %s21, 1
      %p79 = por %p77, %p78
      %p81 = scmp.ne.s32.totalorder %s64, %s80
      %p82 = scmp.eq.s32.totalorder %s21, 0
      %p83 = por %p81, %p82
      %s84 = ssub.s32 %s22, %s34
      %s85 = ssub.s32 %s23, %s30
      %s86 = sor.u32 %s84, %s85
      %p87 = scmp.eq.s32.totalorder %s86, 0
      %s89 = sadd.s32 %s88, 1
      %s90 = scalar_select %p87, %s88, %s89
      %p93 = pneg %p87
      %p94 = scmp.eq.s32.totalorder %s15, 1
      %p95 = por %p93, %p94
      %p96 = scmp.ne.s32.totalorder %s88, %s91
      %p97 = scmp.eq.s32.totalorder %s15, 0
      %p98 = por %p96, %p97
      %p99 = scmp.ne.s32.totalorder %s88, %s91
      %p100 = scmp.eq.s32.totalorder %s20, 1
      %p101 = por %p99, %p100
      %p102 = scmp.ne.s32.totalorder %s91, %s92
      %p103 = scmp.eq.s32.totalorder %s20, 0
      %p104 = por %p102, %p103
      %p105 = scmp.ne.s32.totalorder %s91, %s92
      %p106 = scmp.eq.s32.totalorder %s21, 1
      %p107 = por %p105, %p106
      %p109 = scmp.ne.s32.totalorder %s92, %s108
      %p110 = scmp.eq.s32.totalorder %s21, 0
      %p111 = por %p109, %p110
      %p112 = scmp.le.s32.totalorder 1, %s15
      %p113 = scmp.lt.s32.totalorder %s15, 3
      %p114 = pnand %p112, %p113
      %p115 = pneg %p114
      // Predicated region
      $region9: #{tpu_custom_call.1} parent=5 // pred_check
        _
      $region10: #{tpu_custom_call.1} parent=5 // pred_check_branch
        %117 = sbr.rel (%p114) target = $region12
      $region11: #{tpu_custom_call.1} parent=5 // pred_region
        %s118 = ssub.s32 %s15, 1
        // Predicated region
        $region13: #{tpu_custom_call.1} parent=11 // pred_check
          %p119 = pneg %p48
        $region14: #{tpu_custom_call.1} parent=11 // pred_check_branch
          %121 = sbr.rel (%p119) target = $region16
        $region15: #{tpu_custom_call.1} parent=11 // pred_region
          %s123 = ssub.s32 64, 64
          %124 = vsyncadd [#allocation3], %s123
          %s126 = sshll.u32 [#allocation2], 4
          %s127 = int_to_ptr.vmem [resolvable:$true] %s126
          %129 = dma.hbm_to_vmem [thread:$0]  %s0, 64, %s127, [#allocation3]
        $region16: #{tpu_custom_call.1} parent=11 // pred_fallthru
          _
      $region12: #{tpu_custom_call.1} parent=5 // pred_fallthru
        _
      %p130 = scmp.lt.s32.totalorder %s15, 2
      // Predicated region
      $region17: #{tpu_custom_call.1} parent=5 // pred_check
        %p131 = pneg %p130
      $region18: #{tpu_custom_call.1} parent=5 // pred_check_branch
        %133 = sbr.rel (%p131) target = $region20
      $region19: #{tpu_custom_call.1} parent=5 // pred_region
        // Predicated region
        $region21: #{tpu_custom_call.1} parent=19 // pred_check
          %p134 = pneg %p70
        $region22: #{tpu_custom_call.1} parent=19 // pred_check_branch
          %136 = sbr.rel (%p134) target = $region24
        $region23: #{tpu_custom_call.1} parent=19 // pred_region
          %s137 = sand.u32 %s60, 1
          %s138 = scalar_lea.sflag [#allocation6], %s137
          %s139 = sand.u32 %s60, 1
          %s140 = smul.addr %s139, 8
          %s141 = scalar_lea.vmem [#allocation5], %s140
          %s143 = ssub.s32 128, 128
          %144 = vsyncadd %s138, %s143
          %s145 = smul.addr %s23, 2
          %s146 = smul.addr %s22, 2
          %s147 = sadd.s32 %s145, %s146
          %s148 = smul.addr %s147, 64
          %s149 = scalar_lea.hbm %s1, %s148
          %s151 = sshll.u32 %s141, 4
          %s152 = int_to_ptr.vmem [resolvable:$true] %s151
          %154 = dma.hbm_to_vmem [thread:$0]  %s149, 128, %s152, %s138
        $region24: #{tpu_custom_call.1} parent=19 // pred_fallthru
          _
      $region20: #{tpu_custom_call.1} parent=5 // pred_fallthru
        _
      %p155 = scmp.le.s32.totalorder 1, %s15
      %p156 = scmp.lt.s32.totalorder %s15, 3
      %p157 = pnand %p155, %p156
      %p158 = pneg %p157
      // Predicated region
      $region25: #{tpu_custom_call.1} parent=5 // pred_check
        _
      $region26: #{tpu_custom_call.1} parent=5 // pred_check_branch
        %160 = sbr.rel (%p157) target = $region28
      $region27: #{tpu_custom_call.1} parent=5 // pred_region
        %s161 = ssub.s32 %s15, 1
        // Predicated region
        $region29: #{tpu_custom_call.1} parent=27 // pred_check
          %p162 = pneg %p48
        $region30: #{tpu_custom_call.1} parent=27 // pred_check_branch
          %164 = sbr.rel (%p162) target = $region32
        $region31: #{tpu_custom_call.1} parent=27 // pred_region
          %165 = dma.done [#allocation3], 64
        $region32: #{tpu_custom_call.1} parent=27 // pred_fallthru
          _
        %s166 = sand.u32 %s63, 1
        %s167 = scalar_lea.sflag [#allocation6], %s166
        %s168 = sand.u32 %s63, 1
        %s169 = smul.addr %s168, 8
        %s170 = scalar_lea.vmem [#allocation5], %s169
        // Predicated region
        $region33: #{tpu_custom_call.1} parent=27 // pred_check
          %p171 = pneg %p76
        $region34: #{tpu_custom_call.1} parent=27 // pred_check_branch
          %173 = sbr.rel (%p171) target = $region36
        $region35: #{tpu_custom_call.1} parent=27 // pred_region
          %174 = dma.done %s167, 128
        $region36: #{tpu_custom_call.1} parent=27 // pred_fallthru
          _
        %p175 = pneg %p48
        %p176 = pneg %p45
        %s177 = sand.u32 %s63, 1
        %s178 = scalar_lea.sflag [#allocation6], %s177
        %s179 = sand.u32 %s63, 1
        %s180 = smul.addr %s179, 8
        %s181 = scalar_lea.vmem [#allocation5], %s180
        %p182 = pneg %p76
        %p183 = pneg %p73
        %p184 = pneg %p104
        %p185 = pneg %p101
        %s186 = sand.u32 %s91, 1
        %s187 = scalar_lea.sflag [#allocation4], %s186
        %s188 = sand.u32 %s91, 1
        %s189 = smul.addr %s188, 8
        %s190 = scalar_lea.vmem [#allocation7], %s189
        %v192 = vld [vmem:[%s170] sm:$0xff]
        %v194 = vunpack.c.l.b16 %v192
        %v195 = vunpack.c.h.b16 %v192
        %v196 = vpack.c.b16 %v194, %v194
        %v197 = vpack.c.b16 %v195, %v195
        %198 = vrot.lane.b32.xlu0 %v196, 127
        %v199 = vpop.permute.xlu0 %198
        %200 = vrot.lane.b32.xlu0 %v197, 127
        %v201 = vpop.permute.xlu0 %200
        %vm202 = vcmask 1039360
        %v203 = vsel %vm202, %v199, %v201
        %204 = vrot.lane.b32.xlu0 %v196, 126
        %v205 = vpop.permute.xlu0 %204
        %206 = vrot.lane.b32.xlu0 %v197, 126
        %v207 = vpop.permute.xlu0 %206
        %vm208 = vcmask 1031168
        %v209 = vsel %vm208, %v205, %v207
        %vm210 = vcmask 1043456
        %v213 = vsel %vm210, %v192, %v203
        %v215 = vld [vmem:[#allocation2] sm:$0xf]
        %vm216 = vcmask 195584
        %v218 = vsel %vm216, %v215, 0
        %v221 = vsel %vm210, %v209, 0
        %223 = vmatprep.subr.bf16.mxu0 0
        %224 = vmatpush1.bf16.msra.mxu0 0
        %225 = vmatprep.subr.bf16.mxu0 0
        %226 = vmatpush1.bf16.msra.mxu0 0
        %227 = vmatprep.subr.bf16.mxu0 0
        %228 = vmatpush1.bf16.msra.mxu0 0
        %229 = vmatprep.subr.bf16.mxu0 0
        %230 = vmatpush1.bf16.msra.mxu0 0
        %231 = vmatprep.subr.bf16.mxu0 0
        %232 = vmatpush1.bf16.msra.mxu0 0
        %233 = vmatprep.subr.bf16.mxu0 0
        %234 = vmatpush1.bf16.msra.mxu0 0
        %235 = vmatprep.subr.bf16.mxu0 0
        %236 = vmatpush1.bf16.msra.mxu0 %v221
        %237 = vmatprep.subr.bf16.mxu0 0
        %238 = vmatpush1.bf16.msra.mxu0 %v213
        %239 = vmatprep.subr.bf16.mxu0 0
        %240 = vmatpush2.bf16.msra.mxu0 0
        %241 = vmatprep.subr.bf16.mxu0 0
        %242 = vmatpush2.bf16.msra.mxu0 0
        %243 = vmatprep.subr.bf16.mxu0 0
        %244 = vmatpush2.bf16.msra.mxu0 0
        %245 = vmatprep.subr.bf16.mxu0 0
        %246 = vmatpush2.bf16.msra.mxu0 0
        %247 = vmatprep.subr.bf16.mxu0 0
        %248 = vmatpush2.bf16.msra.mxu0 0
        %249 = vmatprep.subr.bf16.mxu0 0
        %250 = vmatpush2.bf16.msra.mxu0 0
        %251 = vmatprep.subr.bf16.mxu0 0
        %252 = vmatpush2.bf16.msra.mxu0 0
        %253 = vmatprep.subr.bf16.mxu0 0
        %254 = vmatpush2.bf16.msra.mxu0 0
        %255 = vmatprep.mubr.bf16.mxu0 0
        %256 = vmatmul.mubr.bf16.gmra.mxu0 %v218
        %v257 = vpop.f32.mrf.mxu0
        %v258 = vadd.f32 0.0, %v257
        %v259 = vpop.f32.mrf.mxu0
        %v260 = vpop.f32.mrf.mxu0
        %v261 = vpop.f32.mrf.mxu0
        %262 = vdwg.mxu0
        %263 = vst [vmem:[%s190] sm:$0xff] %v258
        %s264 = sand.u32 %s91, 1
        %s265 = scalar_lea.sflag [#allocation4], %s264
        %s266 = sand.u32 %s91, 1
        %s267 = smul.addr %s266, 8
        %s268 = scalar_lea.vmem [#allocation7], %s267
        // Predicated region
        $region37: #{tpu_custom_call.1} parent=27 // pred_check
          %p269 = pneg %p101
        $region38: #{tpu_custom_call.1} parent=27 // pred_check_branch
          %271 = sbr.rel (%p269) target = $region40
        $region39: #{tpu_custom_call.1} parent=27 // pred_region
          %s273 = ssub.s32 128, 128
          %274 = vsyncadd %s265, %s273
          %s275 = sadd.s32 %s25, %s24
          %s276 = smul.addr %s275, 128
          %s277 = scalar_lea.hbm %s2, %s276
          %s279 = sshll.u32 %s268, 4
          %s280 = int_to_ptr.vmem [resolvable:$true] %s279
          %282 = dma.vmem_to_hbm [thread:$0]  %s280, 128, %s277, %s265
        $region40: #{tpu_custom_call.1} parent=27 // pred_fallthru
          _
      $region28: #{tpu_custom_call.1} parent=5 // pred_fallthru
        _
      %p283 = scmp.le.s32.totalorder 2, %s15
      // Predicated region
      $region41: #{tpu_custom_call.1} parent=5 // pred_check
        %p284 = pneg %p283
      $region42: #{tpu_custom_call.1} parent=5 // pred_check_branch
        %286 = sbr.rel (%p284) target = $region44
      $region43: #{tpu_custom_call.1} parent=5 // pred_region
        %s287 = ssub.s32 %s15, 2
        // Predicated region
        $region45: #{tpu_custom_call.1} parent=43 // pred_check
          %p288 = pneg %p107
        $region46: #{tpu_custom_call.1} parent=43 // pred_check_branch
          %290 = sbr.rel (%p288) target = $region48
        $region47: #{tpu_custom_call.1} parent=43 // pred_region
          %s291 = sand.u32 %s92, 1
          %s292 = scalar_lea.sflag [#allocation4], %s291
          %s293 = sand.u32 %s92, 1
          %s294 = smul.addr %s293, 8
          %s295 = scalar_lea.vmem [#allocation7], %s294
          %296 = dma.done %s292, 128
        $region48: #{tpu_custom_call.1} parent=43 // pred_fallthru
          _
      $region44: #{tpu_custom_call.1} parent=5 // pred_fallthru
        _
    $region6: #{tpu_custom_call.1} parent=1 // loop_footer
      %s19 = sadd.s32 1, %s15
    $region7: #{tpu_custom_call.1} parent=1 // loop_footer_branch
      %14 = sbr.rel target = $region3
    $region8: #{tpu_custom_call.1} parent=1 // loop_exit
      _
    %297 = vsyncpa [#allocation3], 1
    %s298 = scalar_lea.sflag [#allocation3], 1
    %299 = vsyncpa %s298, 1
    %300 = vsyncpa [#allocation6], 1
    %s301 = scalar_lea.sflag [#allocation6], 1
    %302 = vsyncpa %s301, 1
    %303 = vsyncpa [#allocation4], 1
    %s304 = scalar_lea.sflag [#allocation4], 1
    %305 = vsyncpa %s304, 1

</llo_original>
